<compile_context>
chip_gen: v7x
topology: tpu7x:2x2x1
jax: 0.10.0
libtpu: 0.0.40
codegen_flags: <defaults>
</compile_context>

<pallas_src>
import jax
import jax.numpy as jnp
from jax.experimental import pallas as pl
from jax.experimental.pallas import tpu as pltpu

# Logical (PyTorch) dims.
D_IN, D_H1, D_H2, D_H3, D_OUT = 325, 250, 150, 100, 52
# Lane-aligned (multiple-of-128) padded dims.
P_IN, P_H1, P_H2, P_H3, P_OUT = 384, 256, 256, 128, 128


def _round_up(x, m):
    return ((x + m - 1) // m) * m


def _default_batch_tile():
    # 256-row tiles match the 2x256^2 MXU on v6e/v7x; v5e's MXU is 4x128^2.
    try:
        kind = jax.devices()[0].device_kind.lower()
        if "v5 lite" in kind or "v5e" in kind:
            return 128
    except Exception:
        pass
    return 256


def gioco_kernel(x_ref, w1_ref, b1_ref, w2_ref, b2_ref,
                 w3_ref, b3_ref, w4_ref, b4_ref, o_ref):
    # Layer 1: Linear(384 -> 256) + ReLU   (bf16 MXU operands, f32 accumulate)
    h = jnp.dot(x_ref[...], w1_ref[...], preferred_element_type=jnp.float32)
    h = jnp.maximum(h + b1_ref[...], 0.0)
    # Layer 2: Linear(256 -> 256) + ReLU
    h = jnp.dot(h.astype(jnp.bfloat16), w2_ref[...],
                preferred_element_type=jnp.float32)
    h = jnp.maximum(h + b2_ref[...], 0.0)
    # Layer 3: Linear(256 -> 128) + ReLU
    h = jnp.dot(h.astype(jnp.bfloat16), w3_ref[...],
                preferred_element_type=jnp.float32)
    h = jnp.maximum(h + b3_ref[...], 0.0)
    # Output layer: Linear(128 -> 128) + sigmoid (exp + recip on the EUP)
    z = jnp.dot(h.astype(jnp.bfloat16), w4_ref[...],
                preferred_element_type=jnp.float32)
    o_ref[...] = jax.nn.sigmoid(z + b4_ref[...])


def gioco_forward(game_state, memory, padded_params, *, batch_tile=None):
    # `memory` is accepted for API parity with the PyTorch module but is unused
    # (the reference forward never touches it).
    del memory
    (w1, b1), (w2, b2), (w3, b3), (w4, b4) = padded_params
    B = game_state.shape[0]

    tb = batch_tile if batch_tile is not None else _default_batch_tile()
    if B <= tb:
        # Small batch: a single grid step sized to the (8-aligned) batch.
        tb = max(8, _round_up(B, 8))
    b_pad = _round_up(B, tb)

    # Zero-pad batch and feature dims; bf16 activations halve the input DMA.
    x = jnp.zeros((b_pad, P_IN), jnp.bfloat16)
    x = x.at[:B, :D_IN].set(game_state.astype(jnp.bfloat16))

    grid = (b_pad // tb,)
    resident = lambda shape: pl.BlockSpec(shape, lambda i: (0, 0))

    flops = 2 * b_pad * (P_IN * P_H1 + P_H1 * P_H2 + P_H2 * P_H3 + P_H3 * P_OUT)
    bytes_accessed = (
        x.size * 2
        + sum(w.size * 2 + b.size * 4 for (w, b) in padded_params)
        + b_pad * P_OUT * 4
    )

    out = pl.pallas_call(
        gioco_kernel,
        out_shape=jax.ShapeDtypeStruct((b_pad, P_OUT), jnp.float32),
        grid=grid,
        in_specs=[
            pl.BlockSpec((tb, P_IN), lambda i: (i, 0)),      # streamed activations
            resident((P_IN, P_H1)), resident((1, P_H1)),      # weights/biases stay
            resident((P_H1, P_H2)), resident((1, P_H2)),      # VMEM-resident across
            resident((P_H2, P_H3)), resident((1, P_H3)),      # all batch tiles
            resident((P_H3, P_OUT)), resident((1, P_OUT)),
        ],
        out_specs=pl.BlockSpec((tb, P_OUT), lambda i: (i, 0)),  # lane-dense output
        compiler_params=pltpu.CompilerParams(
            dimension_semantics=("parallel",)),                 # megacore on v7x
        cost_estimate=pl.CostEstimate(
            flops=flops,
            transcendentals=b_pad * P_OUT,
            bytes_accessed=bytes_accessed),
    )(x, w1, b1, w2, b2, w3, b3, w4, b4)

    # Strip batch padding and the padded output channels (52 logical outputs).
    return out[:B, :D_OUT]


def init_params(key):
    """Deterministic init mimicking nn.Linear default (U[-1/sqrt(fan_in), ...]).

    Returns unpadded float32 (w, b) pairs with w stored (in_features, out_features)
    — transposed vs. PyTorch — so the kernel computes x @ W + b directly.
    """
    dims = [(D_IN, D_H1), (D_H1, D_H2), (D_H2, D_H3), (D_H3, D_OUT)]
    params = []
    for fan_in, fan_out in dims:
        key, kw, kb = jax.random.split(key, 3)
        bound = 1.0 / jnp.sqrt(jnp.float32(fan_in))
        w = jax.random.uniform(kw, (fan_in, fan_out), jnp.float32, -bound, bound)
        b = jax.random.uniform(kb, (fan_out,), jnp.float32, -bound, bound)
        params.append((w, b))
    return params


def pad_params(params):
    """Pre-pad weights/biases to lane-aligned shapes (done once, at init time).

    Weights are cast to bf16 for the MXU; biases stay f32 (shape (1, P_out)).
    Padded rows/cols/bias entries are zero so results are unchanged.
    """
    padded_dims = [(P_IN, P_H1), (P_H1, P_H2), (P_H2, P_H3), (P_H3, P_OUT)]
    out = []
    for (w, b), (pi, po) in zip(params, padded_dims):
        wp = jnp.zeros((pi, po), jnp.bfloat16)
        wp = wp.at[: w.shape[0], : w.shape[1]].set(w.astype(jnp.bfloat16))
        bp = jnp.zeros((1, po), jnp.float32)
        bp = bp.at[0, : b.shape[0]].set(b)
        out.append((wp, bp))
    return out


def reference_forward(game_state, params):
    (w1, b1), (w2, b2), (w3, b3), (w4, b4) = params
    h = jnp.maximum(game_state @ w1 + b1, 0.0)
    h = jnp.maximum(h @ w2 + b2, 0.0)
    h = jnp.maximum(h @ w3 + b3, 0.0)
    return jax.nn.sigmoid(h @ w4 + b4)


if __name__ == "__main__":
    key = jax.random.PRNGKey(0)
    k_params, k_x, k_mem = jax.random.split(key, 3)

    params = init_params(k_params)
    padded = pad_params(params)

    B = 8
    game_state = jax.random.normal(k_x, (B, D_IN), jnp.float32)
    memory = jax.random.normal(k_mem, (B, 16), jnp.float32)  # unused, API parity

    out = gioco_forward(game_state, memory, padded)
    out = jax.block_until_ready(out)

    ref = reference_forward(game_state, params)
    assert out.shape == (B, D_OUT), out.shape
    # bf16 MXU operands with f32 accumulation -> compare against the f32
    # reference with a tolerance appropriate for bf16 matmuls.
    assert jnp.allclose(out, ref, atol=2e-2, rtol=0.0), "mismatch vs. JAX reference"

    print("KERNEL_OK")
</pallas_src>

<mosaic_0001>
module attributes {stable_mosaic.version = 11 : i64} {
  func.func @gioco_kernel(%arg0: i32, %arg1: memref<8x384xbf16, #tpu.memory_space<vmem>>, %arg2: memref<384x256xbf16, #tpu.memory_space<vmem>>, %arg3: memref<1x256xf32, #tpu.memory_space<vmem>>, %arg4: memref<256x256xbf16, #tpu.memory_space<vmem>>, %arg5: memref<1x256xf32, #tpu.memory_space<vmem>>, %arg6: memref<256x128xbf16, #tpu.memory_space<vmem>>, %arg7: memref<1x128xf32, #tpu.memory_space<vmem>>, %arg8: memref<128x128xbf16, #tpu.memory_space<vmem>>, %arg9: memref<1x128xf32, #tpu.memory_space<vmem>>, %arg10: memref<8x128xf32, #tpu.memory_space<vmem>>) attributes {dimension_semantics = [#tpu.dimension_semantics<parallel>], iteration_bounds = array<i64: 1>, scalar_prefetch = 0 : i64, scratch_operands = 0 : i64, tpu.core_type = #tpu.core_type<tc>, window_params = [{transform_indices = @transform_0, window_bounds = array<i64: 8, 384>}, {pipeline_mode = #tpu.pipeline_mode<synchronous>, transform_indices = @transform_1, window_bounds = array<i64: 384, 256>}, {pipeline_mode = #tpu.pipeline_mode<synchronous>, transform_indices = @transform_2, window_bounds = array<i64: 1, 256>}, {pipeline_mode = #tpu.pipeline_mode<synchronous>, transform_indices = @transform_3, window_bounds = array<i64: 256, 256>}, {pipeline_mode = #tpu.pipeline_mode<synchronous>, transform_indices = @transform_4, window_bounds = array<i64: 1, 256>}, {pipeline_mode = #tpu.pipeline_mode<synchronous>, transform_indices = @transform_5, window_bounds = array<i64: 256, 128>}, {pipeline_mode = #tpu.pipeline_mode<synchronous>, transform_indices = @transform_6, window_bounds = array<i64: 1, 128>}, {pipeline_mode = #tpu.pipeline_mode<synchronous>, transform_indices = @transform_7, window_bounds = array<i64: 128, 128>}, {pipeline_mode = #tpu.pipeline_mode<synchronous>, transform_indices = @transform_8, window_bounds = array<i64: 1, 128>}, {transform_indices = @transform_9, window_bounds = array<i64: 8, 128>}]} {
    %c0 = arith.constant 0 : index
    %c0_0 = arith.constant 0 : index
    %0 = vector.load %arg1[%c0, %c0_0] : memref<8x384xbf16, #tpu.memory_space<vmem>>, vector<8x384xbf16>
    %c0_1 = arith.constant 0 : index
    %c0_2 = arith.constant 0 : index
    %1 = vector.load %arg2[%c0_1, %c0_2] : memref<384x256xbf16, #tpu.memory_space<vmem>>, vector<384x256xbf16>
    %cst = arith.constant dense<0.000000e+00> : vector<8x256xf32>
    %2 = tpu.matmul %0, %1, %cst {dimension_numbers = #tpu.dot_dimension_numbers<[1], [0], [0], [1], [0, 0, 1, 1], [], []>} : vector<8x384xbf16>, vector<384x256xbf16>, vector<8x256xf32> -> vector<8x256xf32>
    %c0_3 = arith.constant 0 : index
    %c0_4 = arith.constant 0 : index
    %3 = vector.load %arg3[%c0_3, %c0_4] : memref<1x256xf32, #tpu.memory_space<vmem>>, vector<1x256xf32>
    %4 = vector.broadcast %3 : vector<1x256xf32> to vector<8x256xf32>
    %5 = arith.addf %2, %4 : vector<8x256xf32>
    %cst_5 = arith.constant 0.000000e+00 : f32
    %6 = vector.broadcast %cst_5 : f32 to vector<8x256xf32>
    %7 = arith.maximumf %5, %6 : vector<8x256xf32>
    %8 = arith.truncf %7 : vector<8x256xf32> to vector<8x256xbf16>
    %c0_6 = arith.constant 0 : index
    %c0_7 = arith.constant 0 : index
    %9 = vector.load %arg4[%c0_6, %c0_7] : memref<256x256xbf16, #tpu.memory_space<vmem>>, vector<256x256xbf16>
    %cst_8 = arith.constant dense<0.000000e+00> : vector<8x256xf32>
    %10 = tpu.matmul %8, %9, %cst_8 {dimension_numbers = #tpu.dot_dimension_numbers<[1], [0], [0], [1], [0, 0, 1, 1], [], []>} : vector<8x256xbf16>, vector<256x256xbf16>, vector<8x256xf32> -> vector<8x256xf32>
    %c0_9 = arith.constant 0 : index
    %c0_10 = arith.constant 0 : index
    %11 = vector.load %arg5[%c0_9, %c0_10] : memref<1x256xf32, #tpu.memory_space<vmem>>, vector<1x256xf32>
    %12 = vector.broadcast %11 : vector<1x256xf32> to vector<8x256xf32>
    %13 = arith.addf %10, %12 : vector<8x256xf32>
    %cst_11 = arith.constant 0.000000e+00 : f32
    %14 = vector.broadcast %cst_11 : f32 to vector<8x256xf32>
    %15 = arith.maximumf %13, %14 : vector<8x256xf32>
    %16 = arith.truncf %15 : vector<8x256xf32> to vector<8x256xbf16>
    %c0_12 = arith.constant 0 : index
    %c0_13 = arith.constant 0 : index
    %17 = vector.load %arg6[%c0_12, %c0_13] : memref<256x128xbf16, #tpu.memory_space<vmem>>, vector<256x128xbf16>
    %cst_14 = arith.constant dense<0.000000e+00> : vector<8x128xf32>
    %18 = tpu.matmul %16, %17, %cst_14 {dimension_numbers = #tpu.dot_dimension_numbers<[1], [0], [0], [1], [0, 0, 1, 1], [], []>} : vector<8x256xbf16>, vector<256x128xbf16>, vector<8x128xf32> -> vector<8x128xf32>
    %c0_15 = arith.constant 0 : index
    %c0_16 = arith.constant 0 : index
    %19 = vector.load %arg7[%c0_15, %c0_16] : memref<1x128xf32, #tpu.memory_space<vmem>>, vector<1x128xf32>
    %20 = vector.broadcast %19 : vector<1x128xf32> to vector<8x128xf32>
    %21 = arith.addf %18, %20 : vector<8x128xf32>
    %cst_17 = arith.constant 0.000000e+00 : f32
    %22 = vector.broadcast %cst_17 : f32 to vector<8x128xf32>
    %23 = arith.maximumf %21, %22 : vector<8x128xf32>
    %24 = arith.truncf %23 : vector<8x128xf32> to vector<8x128xbf16>
    %c0_18 = arith.constant 0 : index
    %c0_19 = arith.constant 0 : index
    %25 = vector.load %arg8[%c0_18, %c0_19] : memref<128x128xbf16, #tpu.memory_space<vmem>>, vector<128x128xbf16>
    %cst_20 = arith.constant dense<0.000000e+00> : vector<8x128xf32>
    %26 = tpu.matmul %24, %25, %cst_20 {dimension_numbers = #tpu.dot_dimension_numbers<[1], [0], [0], [1], [0, 0, 1, 1], [], []>} : vector<8x128xbf16>, vector<128x128xbf16>, vector<8x128xf32> -> vector<8x128xf32>
    %c0_21 = arith.constant 0 : index
    %c0_22 = arith.constant 0 : index
    %27 = vector.load %arg9[%c0_21, %c0_22] : memref<1x128xf32, #tpu.memory_space<vmem>>, vector<1x128xf32>
    %28 = vector.broadcast %27 : vector<1x128xf32> to vector<8x128xf32>
    %29 = arith.addf %26, %28 : vector<8x128xf32>
    %30 = arith.negf %29 : vector<8x128xf32>
    %31 = math.exp %30 : vector<8x128xf32>
    %cst_23 = arith.constant 1.000000e+00 : f32
    %32 = vector.broadcast %cst_23 : f32 to vector<8x128xf32>
    %33 = arith.addf %32, %31 : vector<8x128xf32>
    %34 = arith.divf %32, %33 : vector<8x128xf32>
    %c0_24 = arith.constant 0 : index
    %c0_25 = arith.constant 0 : index
    %35 = vector.load %arg10[%c0_24, %c0_25] : memref<8x128xf32, #tpu.memory_space<vmem>>, vector<8x128xf32>
    tpu.vector_store %arg10[%c0_24, %c0_25], %34 {strides = array<i32>} : memref<8x128xf32, #tpu.memory_space<vmem>>, vector<8x128xf32>,
    return
  }
  func.func @transform_0(%arg0: i32) -> (i32, i32) {
    %c0_i32 = arith.constant 0 : i32
    %c0_i32_0 = arith.constant 0 : i32
    return %arg0, %c0_i32 : i32, i32
  }
  func.func @transform_1(%arg0: i32) -> (i32, i32) {
    %c0_i32 = arith.constant 0 : i32
    %c0_i32_0 = arith.constant 0 : i32
    %c0_i32_1 = arith.constant 0 : i32
    return %c0_i32, %c0_i32_0 : i32, i32
  }
  func.func @transform_2(%arg0: i32) -> (i32, i32) {
    %c0_i32 = arith.constant 0 : i32
    %c0_i32_0 = arith.constant 0 : i32
    %c0_i32_1 = arith.constant 0 : i32
    return %c0_i32, %c0_i32_0 : i32, i32
  }
  func.func @transform_3(%arg0: i32) -> (i32, i32) {
    %c0_i32 = arith.constant 0 : i32
    %c0_i32_0 = arith.constant 0 : i32
    %c0_i32_1 = arith.constant 0 : i32
    return %c0_i32, %c0_i32_0 : i32, i32
  }
  func.func @transform_4(%arg0: i32) -> (i32, i32) {
    %c0_i32 = arith.constant 0 : i32
    %c0_i32_0 = arith.constant 0 : i32
    %c0_i32_1 = arith.constant 0 : i32
    return %c0_i32, %c0_i32_0 : i32, i32
  }
  func.func @transform_5(%arg0: i32) -> (i32, i32) {
    %c0_i32 = arith.constant 0 : i32
    %c0_i32_0 = arith.constant 0 : i32
    %c0_i32_1 = arith.constant 0 : i32
    return %c0_i32, %c0_i32_0 : i32, i32
  }
  func.func @transform_6(%arg0: i32) -> (i32, i32) {
    %c0_i32 = arith.constant 0 : i32
    %c0_i32_0 = arith.constant 0 : i32
    %c0_i32_1 = arith.constant 0 : i32
    return %c0_i32, %c0_i32_0 : i32, i32
  }
  func.func @transform_7(%arg0: i32) -> (i32, i32) {
    %c0_i32 = arith.constant 0 : i32
    %c0_i32_0 = arith.constant 0 : i32
    %c0_i32_1 = arith.constant 0 : i32
    return %c0_i32, %c0_i32_0 : i32, i32
  }
  func.func @transform_8(%arg0: i32) -> (i32, i32) {
    %c0_i32 = arith.constant 0 : i32
    %c0_i32_0 = arith.constant 0 : i32
    %c0_i32_1 = arith.constant 0 : i32
    return %c0_i32, %c0_i32_0 : i32, i32
  }
  func.func @transform_9(%arg0: i32) -> (i32, i32) {
    %c0_i32 = arith.constant 0 : i32
    %c0_i32_0 = arith.constant 0 : i32
    return %arg0, %c0_i32 : i32, i32
  }
}

</mosaic_0001>

<llo_original>
// kernel: tpu_custom_call.1
$region0: #{tpu_custom_call.1}
  #allocation0 [shape = 'u32[]', space=smem, size = 0x4, offset = 0x4, fixed_abs, tag = 'smem constant byte address 0x4 - core index']
  #allocation1 [shape = 'u32[144,128]{1,0:T(1,128)}', space=vmem, size = 0x12000, scoped, tag = 'internal scratch']
  %s0 = inlined_call_operand.hbm [shape: bf16[8,384], index: 0, kind: input, shape index: {}]
  %s1 = inlined_call_operand.hbm [shape: bf16[384,256], index: 1, kind: input, shape index: {}]
  %s2 = inlined_call_operand.vmem [shape: f32[1,256], index: 2, kind: input, shape index: {}]
  %s3 = inlined_call_operand.hbm [shape: bf16[256,256], index: 3, kind: input, shape index: {}]
  %s4 = inlined_call_operand.vmem [shape: f32[1,256], index: 4, kind: input, shape index: {}]
  %s5 = inlined_call_operand.hbm [shape: bf16[256,128], index: 5, kind: input, shape index: {}]
  %s6 = inlined_call_operand.vmem [shape: f32[1,128], index: 6, kind: input, shape index: {}]
  %s7 = inlined_call_operand.hbm [shape: bf16[128,128], index: 7, kind: input, shape index: {}]
  %s8 = inlined_call_operand.vmem [shape: f32[1,128], index: 8, kind: input, shape index: {}]
  %s9 = inlined_call_operand.hbm [shape: f32[8,128], index: 9, kind: output, shape index: {}]
  %s10 = sld [smem:[#allocation0]]
  $region66: #{tpu_custom_call.1} parent=0
    _
  %s12 = ssub.s32 1, %s10
  %s13 = scalar_select 0, %s12, %s10
  $region1: #{tpu_custom_call.1} parent=0
    #allocation2 [shape = 'u8[6144]{0}', space=vmem, size = 0x1800, scoped, tag = 'input window, operand 0, single buffered']
    #allocation3 [shape = 's32[1]{0}', space=sflag, size = 0x4, scoped, tag = 'scoped memory for tpu_custom_call.1']
    #allocation4 [shape = 's32[1]{0}', space=sflag, size = 0x4, scoped, tag = 'scoped memory for tpu_custom_call.1']
    #allocation5 [shape = 'u8[196608]{0}', space=vmem, size = 0x30000, scoped, tag = 'input window, operand 1, single buffered']
    #allocation6 [shape = 's32[1]{0}', space=sflag, size = 0x4, scoped, tag = 'scoped memory for tpu_custom_call.1']
    #allocation7 [shape = 'u8[131072]{0}', space=vmem, size = 0x20000, scoped, tag = 'input window, operand 3, single buffered']
    #allocation8 [shape = 'u8[65536]{0}', space=vmem, size = 0x10000, scoped, tag = 'input window, operand 5, single buffered']
    #allocation9 [shape = 's32[1]{0}', space=sflag, size = 0x4, scoped, tag = 'scoped memory for tpu_custom_call.1']
    #allocation10 [shape = 'u8[32768]{0}', space=vmem, size = 0x8000, scoped, tag = 'input window, operand 7, single buffered']
    #allocation11 [shape = 'u8[4096]{0}', space=vmem, size = 0x1000, scoped, tag = 'output window, operand 0, single buffered']
    %14 = vsyncpa [#allocation3], 0
    %15 = vsyncpa [#allocation6], 0
    %16 = vsyncpa [#allocation9], 0
    %17 = vsyncpa [#allocation4], 0
    // Predicated region
    $region2: #{tpu_custom_call.1} parent=1 // pred_check
      _
    $region3: #{tpu_custom_call.1} parent=1 // pred_check_branch
      %19 = sbr.rel (0) target = $region5
    $region4: #{tpu_custom_call.1} parent=1 // pred_region
      %s21 = ssub.s32 192, 192
      %22 = vsyncadd [#allocation3], %s21
      %s24 = sshll.u32 [#allocation2], 4
      %s25 = int_to_ptr.vmem [resolvable:$true] %s24
      %27 = dma.hbm_to_vmem [thread:$0]  %s0, 192, %s25, [#allocation3]
    $region5: #{tpu_custom_call.1} parent=1 // pred_fallthru
      _
    // Predicated region
    $region6: #{tpu_custom_call.1} parent=1 // pred_check
      _
    $region7: #{tpu_custom_call.1} parent=1 // pred_check_branch
      %29 = sbr.rel (0) target = $region9
    $region8: #{tpu_custom_call.1} parent=1 // pred_region
      %s31 = ssub.s32 6144, 6144
      %32 = vsyncadd [#allocation6], %s31
      %s33 = sshll.u32 [#allocation5], 4
      %s34 = int_to_ptr.vmem [resolvable:$true] %s33
      %39 = dma.hbm_to_vmem [thread:$0]  %s1, 6144, %s34, [#allocation6], 128, 128, 8
    $region9: #{tpu_custom_call.1} parent=1 // pred_fallthru
      _
    // Predicated region
    $region10: #{tpu_custom_call.1} parent=1 // pred_check
      _
    $region11: #{tpu_custom_call.1} parent=1 // pred_check_branch
      %41 = sbr.rel (0) target = $region13
    $region12: #{tpu_custom_call.1} parent=1 // pred_region
      _
    $region13: #{tpu_custom_call.1} parent=1 // pred_fallthru
      _
    // Predicated region
    $region14: #{tpu_custom_call.1} parent=1 // pred_check
      _
    $region15: #{tpu_custom_call.1} parent=1 // pred_check_branch
      %43 = sbr.rel (0) target = $region17
    $region16: #{tpu_custom_call.1} parent=1 // pred_region
      %s45 = ssub.s32 4096, 4096
      %46 = vsyncadd [#allocation6], %s45
      %s47 = sshll.u32 [#allocation7], 4
      %s48 = int_to_ptr.vmem [resolvable:$true] %s47
      %53 = dma.hbm_to_vmem [thread:$0]  %s3, 4096, %s48, [#allocation6], 128, 128, 8
    $region17: #{tpu_custom_call.1} parent=1 // pred_fallthru
      _
    // Predicated region
    $region18: #{tpu_custom_call.1} parent=1 // pred_check
      _
    $region19: #{tpu_custom_call.1} parent=1 // pred_check_branch
      %55 = sbr.rel (0) target = $region21
    $region20: #{tpu_custom_call.1} parent=1 // pred_region
      _
    $region21: #{tpu_custom_call.1} parent=1 // pred_fallthru
      _
    // Predicated region
    $region22: #{tpu_custom_call.1} parent=1 // pred_check
      _
    $region23: #{tpu_custom_call.1} parent=1 // pred_check_branch
      %57 = sbr.rel (0) target = $region25
    $region24: #{tpu_custom_call.1} parent=1 // pred_region
      %s59 = ssub.s32 2048, 2048
      %60 = vsyncadd [#allocation9], %s59
      %s61 = sshll.u32 [#allocation8], 4
      %s62 = int_to_ptr.vmem [resolvable:$true] %s61
      %67 = dma.hbm_to_vmem [thread:$0]  %s5, 2048, %s62, [#allocation9], 64, 64, 4
    $region25: #{tpu_custom_call.1} parent=1 // pred_fallthru
      _
    // Predicated region
    $region26: #{tpu_custom_call.1} parent=1 // pred_check
      _
    $region27: #{tpu_custom_call.1} parent=1 // pred_check_branch
      %69 = sbr.rel (0) target = $region29
    $region28: #{tpu_custom_call.1} parent=1 // pred_region
      _
    $region29: #{tpu_custom_call.1} parent=1 // pred_fallthru
      _
    // Predicated region
    $region30: #{tpu_custom_call.1} parent=1 // pred_check
      _
    $region31: #{tpu_custom_call.1} parent=1 // pred_check_branch
      %71 = sbr.rel (0) target = $region33
    $region32: #{tpu_custom_call.1} parent=1 // pred_region
      %s73 = ssub.s32 1024, 1024
      %74 = vsyncadd [#allocation9], %s73
      %s75 = sshll.u32 [#allocation10], 4
      %s76 = int_to_ptr.vmem [resolvable:$true] %s75
      %81 = dma.hbm_to_vmem [thread:$0]  %s7, 1024, %s76, [#allocation9], 64, 64, 4
    $region33: #{tpu_custom_call.1} parent=1 // pred_fallthru
      _
    // Predicated region
    $region34: #{tpu_custom_call.1} parent=1 // pred_check
      _
    $region35: #{tpu_custom_call.1} parent=1 // pred_check_branch
      %83 = sbr.rel (0) target = $region37
    $region36: #{tpu_custom_call.1} parent=1 // pred_region
      _
    $region37: #{tpu_custom_call.1} parent=1 // pred_fallthru
      _
    // Predicated region
    $region38: #{tpu_custom_call.1} parent=1 // pred_check
      _
    $region39: #{tpu_custom_call.1} parent=1 // pred_check_branch
      %85 = sbr.rel (0) target = $region41
    $region40: #{tpu_custom_call.1} parent=1 // pred_region
      %86 = dma.done [#allocation3], 192
    $region41: #{tpu_custom_call.1} parent=1 // pred_fallthru
      _
    // Predicated region
    $region42: #{tpu_custom_call.1} parent=1 // pred_check
      _
    $region43: #{tpu_custom_call.1} parent=1 // pred_check_branch
      %88 = sbr.rel (0) target = $region45
    $region44: #{tpu_custom_call.1} parent=1 // pred_region
      %89 = dma.done [#allocation6], 6144
    $region45: #{tpu_custom_call.1} parent=1 // pred_fallthru
      _
    // Predicated region
    $region46: #{tpu_custom_call.1} parent=1 // pred_check
      _
    $region47: #{tpu_custom_call.1} parent=1 // pred_check_branch
      %91 = sbr.rel (0) target = $region49
    $region48: #{tpu_custom_call.1} parent=1 // pred_region
      %92 = dma.done [#allocation6], 4096
    $region49: #{tpu_custom_call.1} parent=1 // pred_fallthru
      _
    // Predicated region
    $region50: #{tpu_custom_call.1} parent=1 // pred_check
      _
    $region51: #{tpu_custom_call.1} parent=1 // pred_check_branch
      %94 = sbr.rel (0) target = $region53
    $region52: #{tpu_custom_call.1} parent=1 // pred_region
      %95 = dma.done [#allocation9], 2048
    $region53: #{tpu_custom_call.1} parent=1 // pred_fallthru
      _
    // Predicated region
    $region54: #{tpu_custom_call.1} parent=1 // pred_check
      _
    $region55: #{tpu_custom_call.1} parent=1 // pred_check_branch
      %97 = sbr.rel (0) target = $region57
    $region56: #{tpu_custom_call.1} parent=1 // pred_region
      %98 = dma.done [#allocation9], 1024
    $region57: #{tpu_custom_call.1} parent=1 // pred_fallthru
      _
    %v100 = vld [vmem:[#allocation2] sm:$0xff]
    %v101 = vld [vmem:[#allocation2 + $0x8] sm:$0xf]
    %v102 = vld [vmem:[#allocation5] sm:$0xff]
    %v103 = vld [vmem:[#allocation5 + $0x8] sm:$0xff]
    %v104 = vld [vmem:[#allocation5 + $0x10] sm:$0xff]
    %v105 = vld [vmem:[#allocation5 + $0x18] sm:$0xff]
    %v106 = vld [vmem:[#allocation5 + $0x20] sm:$0xff]
    %v107 = vld [vmem:[#allocation5 + $0x28] sm:$0xff]
    %v108 = vld [vmem:[#allocation5 + $0x30] sm:$0xff]
    %v109 = vld [vmem:[#allocation5 + $0x38] sm:$0xff]
    %v110 = vld [vmem:[#allocation5 + $0x40] sm:$0xff]
    %v111 = vld [vmem:[#allocation5 + $0x48] sm:$0xff]
    %v112 = vld [vmem:[#allocation5 + $0x50] sm:$0xff]
    %v113 = vld [vmem:[#allocation5 + $0x58] sm:$0xff]
    %v114 = vld [vmem:[#allocation5 + $0x60] sm:$0xff]
    %v115 = vld [vmem:[#allocation5 + $0x68] sm:$0xff]
    %v116 = vld [vmem:[#allocation5 + $0x70] sm:$0xff]
    %v117 = vld [vmem:[#allocation5 + $0x78] sm:$0xff]
    %v118 = vld [vmem:[#allocation5 + $0x80] sm:$0xff]
    %v119 = vld [vmem:[#allocation5 + $0x88] sm:$0xff]
    %v120 = vld [vmem:[#allocation5 + $0x90] sm:$0xff]
    %v121 = vld [vmem:[#allocation5 + $0x98] sm:$0xff]
    %v122 = vld [vmem:[#allocation5 + $0xa0] sm:$0xff]
    %v123 = vld [vmem:[#allocation5 + $0xa8] sm:$0xff]
    %v124 = vld [vmem:[#allocation5 + $0xb0] sm:$0xff]
    %v125 = vld [vmem:[#allocation5 + $0xb8] sm:$0xff]
    %v126 = vld [vmem:[#allocation5 + $0xc0] sm:$0xff]
    %v127 = vld [vmem:[#allocation5 + $0xc8] sm:$0xff]
    %v128 = vld [vmem:[#allocation5 + $0xd0] sm:$0xff]
    %v129 = vld [vmem:[#allocation5 + $0xd8] sm:$0xff]
    %v130 = vld [vmem:[#allocation5 + $0xe0] sm:$0xff]
    %v131 = vld [vmem:[#allocation5 + $0xe8] sm:$0xff]
    %v132 = vld [vmem:[#allocation5 + $0xf0] sm:$0xff]
    %v133 = vld [vmem:[#allocation5 + $0xf8] sm:$0xff]
    %v134 = vld [vmem:[#allocation5 + $0x100] sm:$0xff]
    %v135 = vld [vmem:[#allocation5 + $0x108] sm:$0xff]
    %v136 = vld [vmem:[#allocation5 + $0x110] sm:$0xff]
    %v137 = vld [vmem:[#allocation5 + $0x118] sm:$0xff]
    %v138 = vld [vmem:[#allocation5 + $0x120] sm:$0xff]
    %v139 = vld [vmem:[#allocation5 + $0x128] sm:$0xff]
    %v140 = vld [vmem:[#allocation5 + $0x130] sm:$0xff]
    %v141 = vld [vmem:[#allocation5 + $0x138] sm:$0xff]
    %v142 = vld [vmem:[#allocation5 + $0x140] sm:$0xff]
    %v143 = vld [vmem:[#allocation5 + $0x148] sm:$0xff]
    %v144 = vld [vmem:[#allocation5 + $0x150] sm:$0xff]
    %v145 = vld [vmem:[#allocation5 + $0x158] sm:$0xff]
    %v146 = vld [vmem:[#allocation5 + $0x160] sm:$0xff]
    %v147 = vld [vmem:[#allocation5 + $0x168] sm:$0xff]
    %v148 = vld [vmem:[#allocation5 + $0x170] sm:$0xff]
    %v149 = vld [vmem:[#allocation5 + $0x178] sm:$0xff]
    %v150 = vld [vmem:[%s2] sm:$0x3]
    %v152 = vlaneseq
    %v153 = vshrl.u32 %v152, 7
    %v154 = vsub.s32 0, %v153
    %v155 = vrot.slane %v150, %v154
    %v156 = vlaneseq
    %v157 = vshrl.u32 %v156, 7
    %v158 = vsub.s32 1, %v157
    %v159 = vrot.slane %v150, %v158
    %v164 = vunpack.c.l.b16 %v100
    %v165 = vunpack.c.h.b16 %v100
    %v166 = vunpack.c.l.b16 %v101
    %v167 = vpack.c.b16 %v164, %v164
    %v168 = vpack.c.b16 %v165, %v165
    %v169 = vpack.c.b16 %v166, %v166
    %v221 = vunpack.c.l.b16 %v102
    %v222 = vunpack.c.h.b16 %v102
    %v223 = vunpack.c.l.b16 %v103
    %v224 = vunpack.c.h.b16 %v103
    %v225 = vunpack.c.l.b16 %v104
    %v226 = vunpack.c.h.b16 %v104
    %v227 = vunpack.c.l.b16 %v105
    %v228 = vunpack.c.h.b16 %v105
    %v229 = vunpack.c.l.b16 %v106
    %v230 = vunpack.c.h.b16 %v106
    %v231 = vunpack.c.l.b16 %v107
    %v232 = vunpack.c.h.b16 %v107
    %v233 = vunpack.c.l.b16 %v108
    %v234 = vunpack.c.h.b16 %v108
    %v235 = vunpack.c.l.b16 %v109
    %v236 = vunpack.c.h.b16 %v109
    %v237 = vunpack.c.l.b16 %v110
    %v238 = vunpack.c.h.b16 %v110
    %v239 = vunpack.c.l.b16 %v111
    %v240 = vunpack.c.h.b16 %v111
    %v241 = vunpack.c.l.b16 %v112
    %v242 = vunpack.c.h.b16 %v112
    %v243 = vunpack.c.l.b16 %v113
    %v244 = vunpack.c.h.b16 %v113
    %v245 = vunpack.c.l.b16 %v114
    %v246 = vunpack.c.h.b16 %v114
    %v247 = vunpack.c.l.b16 %v115
    %v248 = vunpack.c.h.b16 %v115
    %v249 = vunpack.c.l.b16 %v116
    %v250 = vunpack.c.h.b16 %v116
    %v251 = vunpack.c.l.b16 %v117
    %v252 = vunpack.c.h.b16 %v117
    %v253 = vunpack.c.l.b16 %v118
    %v254 = vunpack.c.h.b16 %v118
    %v255 = vunpack.c.l.b16 %v119
    %v256 = vunpack.c.h.b16 %v119
    %v257 = vunpack.c.l.b16 %v120
    %v258 = vunpack.c.h.b16 %v120
    %v259 = vunpack.c.l.b16 %v121
    %v260 = vunpack.c.h.b16 %v121
    %v261 = vunpack.c.l.b16 %v122
    %v262 = vunpack.c.h.b16 %v122
    %v263 = vunpack.c.l.b16 %v123
    %v264 = vunpack.c.h.b16 %v123
    %v265 = vunpack.c.l.b16 %v124
    %v266 = vunpack.c.h.b16 %v124
    %v267 = vunpack.c.l.b16 %v125
    %v268 = vunpack.c.h.b16 %v125
    %v269 = vunpack.c.l.b16 %v126
    %v270 = vunpack.c.h.b16 %v126
    %v271 = vunpack.c.l.b16 %v127
    %v272 = vunpack.c.h.b16 %v127
    %v273 = vunpack.c.l.b16 %v128
    %v274 = vunpack.c.h.b16 %v128
    %v275 = vunpack.c.l.b16 %v129
    %v276 = vunpack.c.h.b16 %v129
    %v277 = vunpack.c.l.b16 %v130
    %v278 = vunpack.c.h.b16 %v130
    %v279 = vunpack.c.l.b16 %v131
    %v280 = vunpack.c.h.b16 %v131
    %v281 = vunpack.c.l.b16 %v132
    %v282 = vunpack.c.h.b16 %v132
    %v283 = vunpack.c.l.b16 %v133
    %v284 = vunpack.c.h.b16 %v133
    %v285 = vunpack.c.l.b16 %v134
    %v286 = vunpack.c.h.b16 %v134
    %v287 = vunpack.c.l.b16 %v135
    %v288 = vunpack.c.h.b16 %v135
    %v289 = vunpack.c.l.b16 %v136
    %v290 = vunpack.c.h.b16 %v136
    %v291 = vunpack.c.l.b16 %v137
    %v292 = vunpack.c.h.b16 %v137
    %v293 = vunpack.c.l.b16 %v138
    %v294 = vunpack.c.h.b16 %v138
    %v295 = vunpack.c.l.b16 %v139
    %v296 = vunpack.c.h.b16 %v139
    %v297 = vunpack.c.l.b16 %v140
    %v298 = vunpack.c.h.b16 %v140
    %v299 = vunpack.c.l.b16 %v141
    %v300 = vunpack.c.h.b16 %v141
    %v301 = vunpack.c.l.b16 %v142
    %v302 = vunpack.c.h.b16 %v142
    %v303 = vunpack.c.l.b16 %v143
    %v304 = vunpack.c.h.b16 %v143
    %v305 = vunpack.c.l.b16 %v144
    %v306 = vunpack.c.h.b16 %v144
    %v307 = vunpack.c.l.b16 %v145
    %v308 = vunpack.c.h.b16 %v145
    %v309 = vunpack.c.l.b16 %v146
    %v310 = vunpack.c.h.b16 %v146
    %v311 = vunpack.c.l.b16 %v147
    %v312 = vunpack.c.h.b16 %v147
    %v313 = vunpack.c.l.b16 %v148
    %v314 = vunpack.c.h.b16 %v148
    %v315 = vunpack.c.l.b16 %v149
    %v316 = vunpack.c.h.b16 %v149
    %v317 = vpack.c.b16 %v223, %v221
    %v318 = vpack.c.b16 %v224, %v222
    %v319 = vpack.c.b16 %v227, %v225
    %v320 = vpack.c.b16 %v228, %v226
    %v321 = vpack.c.b16 %v231, %v229
    %v322 = vpack.c.b16 %v232, %v230
    %v323 = vpack.c.b16 %v235, %v233
    %v324 = vpack.c.b16 %v236, %v234
    %v325 = vpack.c.b16 %v239, %v237
    %v326 = vpack.c.b16 %v240, %v238
    %v327 = vpack.c.b16 %v243, %v241
    %v328 = vpack.c.b16 %v244, %v242
    %v329 = vpack.c.b16 %v247, %v245
    %v330 = vpack.c.b16 %v248, %v246
    %v331 = vpack.c.b16 %v251, %v249
    %v332 = vpack.c.b16 %v252, %v250
    %v333 = vpack.c.b16 %v255, %v253
    %v334 = vpack.c.b16 %v256, %v254
    %v335 = vpack.c.b16 %v259, %v257
    %v336 = vpack.c.b16 %v260, %v258
    %v337 = vpack.c.b16 %v263, %v261
    %v338 = vpack.c.b16 %v264, %v262
    %v339 = vpack.c.b16 %v267, %v265
    %v340 = vpack.c.b16 %v268, %v266
    %v341 = vpack.c.b16 %v271, %v269
    %v342 = vpack.c.b16 %v272, %v270
    %v343 = vpack.c.b16 %v275, %v273
    %v344 = vpack.c.b16 %v276, %v274
    %v345 = vpack.c.b16 %v279, %v277
    %v346 = vpack.c.b16 %v280, %v278
    %v347 = vpack.c.b16 %v283, %v281
    %v348 = vpack.c.b16 %v284, %v282
    %v349 = vpack.c.b16 %v287, %v285
    %v350 = vpack.c.b16 %v288, %v286
    %v351 = vpack.c.b16 %v291, %v289
    %v352 = vpack.c.b16 %v292, %v290
    %v353 = vpack.c.b16 %v295, %v293
    %v354 = vpack.c.b16 %v296, %v294
    %v355 = vpack.c.b16 %v299, %v297
    %v356 = vpack.c.b16 %v300, %v298
    %v357 = vpack.c.b16 %v303, %v301
    %v358 = vpack.c.b16 %v304, %v302
    %v359 = vpack.c.b16 %v307, %v305
    %v360 = vpack.c.b16 %v308, %v306
    %v361 = vpack.c.b16 %v311, %v309
    %v362 = vpack.c.b16 %v312, %v310
    %v363 = vpack.c.b16 %v315, %v313
    %v364 = vpack.c.b16 %v316, %v314
    %413 = vmatprep.subr.bf16.mxu0 %v318
    %414 = vmatpush1.bf16.msra.mxu0 %v317
    %415 = vmatprep.subr.bf16.mxu0 %v320
    %416 = vmatpush1.bf16.msra.mxu0 %v319
    %417 = vmatprep.subr.bf16.mxu0 %v322
    %418 = vmatpush1.bf16.msra.mxu0 %v321
    %419 = vmatprep.subr.bf16.mxu0 %v324
    %420 = vmatpush1.bf16.msra.mxu0 %v323
    %421 = vmatprep.subr.bf16.mxu0 %v326
    %422 = vmatpush1.bf16.msra.mxu0 %v325
    %423 = vmatprep.subr.bf16.mxu0 %v328
    %424 = vmatpush1.bf16.msra.mxu0 %v327
    %425 = vmatprep.subr.bf16.mxu0 %v330
    %426 = vmatpush1.bf16.msra.mxu0 %v329
    %427 = vmatprep.subr.bf16.mxu0 %v332
    %428 = vmatpush1.bf16.msra.mxu0 %v331
    %429 = vmatprep.subr.bf16.mxu0 %v334
    %430 = vmatpush1.bf16.msra.mxu0 %v333
    %431 = vmatprep.subr.bf16.mxu0 %v336
    %432 = vmatpush1.bf16.msra.mxu0 %v335
    %433 = vmatprep.subr.bf16.mxu0 %v338
    %434 = vmatpush1.bf16.msra.mxu0 %v337
    %435 = vmatprep.subr.bf16.mxu0 %v340
    %436 = vmatpush1.bf16.msra.mxu0 %v339
    %437 = vmatprep.subr.bf16.mxu0 %v342
    %438 = vmatpush1.bf16.msra.mxu0 %v341
    %439 = vmatprep.subr.bf16.mxu0 %v344
    %440 = vmatpush1.bf16.msra.mxu0 %v343
    %441 = vmatprep.subr.bf16.mxu0 %v346
    %442 = vmatpush1.bf16.msra.mxu0 %v345
    %443 = vmatprep.subr.bf16.mxu0 %v348
    %444 = vmatpush1.bf16.msra.mxu0 %v347
    %445 = vmatprep.mubr.bf16.mxu0 %v168
    %446 = vmatmul.mubr.bf16.gmra.mrb[0].mxu0 %v167
    %v447 = vpop.f32.mrb[0].mxu0
    %v448 = vadd.f32 %v155, %v447
    %v449 = vpop.f32.mrb[0].mxu0
    %v450 = vadd.f32 %v159, %v449
    %v451 = vpop.f32.mrb[0].mxu0
    %v452 = vpop.f32.mrb[0].mxu0
    %453 = vdwg.mxu0
    %454 = vmatprep.subr.bf16.mxu0 %v350
    %455 = vmatpush1.bf16.msra.mxu0 %v349
    %456 = vmatprep.subr.bf16.mxu0 %v352
    %457 = vmatpush1.bf16.msra.mxu0 %v351
    %458 = vmatprep.subr.bf16.mxu0 %v354
    %459 = vmatpush1.bf16.msra.mxu0 %v353
    %460 = vmatprep.subr.bf16.mxu0 %v356
    %461 = vmatpush1.bf16.msra.mxu0 %v355
    %462 = vmatprep.subr.bf16.mxu0 %v358
    %463 = vmatpush1.bf16.msra.mxu0 %v357
    %464 = vmatprep.subr.bf16.mxu0 %v360
    %465 = vmatpush1.bf16.msra.mxu0 %v359
    %466 = vmatprep.subr.bf16.mxu0 %v362
    %467 = vmatpush1.bf16.msra.mxu0 %v361
    %468 = vmatprep.subr.bf16.mxu0 %v364
    %469 = vmatpush1.bf16.msra.mxu0 %v363
    %470 = vmatprep.subr.bf16.mxu0 0
    %471 = vmatpush1.bf16.msra.mxu0 0
    %472 = vmatprep.subr.bf16.mxu0 0
    %473 = vmatpush1.bf16.msra.mxu0 0
    %474 = vmatprep.subr.bf16.mxu0 0
    %475 = vmatpush1.bf16.msra.mxu0 0
    %476 = vmatprep.subr.bf16.mxu0 0
    %477 = vmatpush1.bf16.msra.mxu0 0
    %478 = vmatprep.subr.bf16.mxu0 0
    %479 = vmatpush1.bf16.msra.mxu0 0
    %480 = vmatprep.subr.bf16.mxu0 0
    %481 = vmatpush1.bf16.msra.mxu0 0
    %482 = vmatprep.subr.bf16.mxu0 0
    %483 = vmatpush1.bf16.msra.mxu0 0
    %484 = vmatprep.subr.bf16.mxu0 0
    %485 = vmatpush1.bf16.msra.mxu0 0
    %486 = vmatprep.mubr.bf16.mxu0 0
    %487 = vmatmul.mubr.bf16.gmra.mrb[0].mxu0 %v169
    %v488 = vpop.f32.mrb[0].mxu0
    %v489 = vadd.f32 %v448, %v488
    %v490 = vpop.f32.mrb[0].mxu0
    %v491 = vadd.f32 %v450, %v490
    %v492 = vpop.f32.mrb[0].mxu0
    %v493 = vpop.f32.mrb[0].mxu0
    %494 = vdwg.mxu0
    %v495 = vmax.f32 %v489, 0.0
    %v496 = vmax.f32 %v491, 0.0
    %v497 = vpack.c.bf16 %v495, %v495
    %v498 = vpack.c.bf16 %v496, %v496
    %v499 = vld [vmem:[#allocation7] sm:$0xff]
    %v500 = vld [vmem:[#allocation7 + $0x8] sm:$0xff]
    %v501 = vld [vmem:[#allocation7 + $0x10] sm:$0xff]
    %v502 = vld [vmem:[#allocation7 + $0x18] sm:$0xff]
    %v503 = vld [vmem:[#allocation7 + $0x20] sm:$0xff]
    %v504 = vld [vmem:[#allocation7 + $0x28] sm:$0xff]
    %v505 = vld [vmem:[#allocation7 + $0x30] sm:$0xff]
    %v506 = vld [vmem:[#allocation7 + $0x38] sm:$0xff]
    %v507 = vld [vmem:[#allocation7 + $0x40] sm:$0xff]
    %v508 = vld [vmem:[#allocation7 + $0x48] sm:$0xff]
    %v509 = vld [vmem:[#allocation7 + $0x50] sm:$0xff]
    %v510 = vld [vmem:[#allocation7 + $0x58] sm:$0xff]
    %v511 = vld [vmem:[#allocation7 + $0x60] sm:$0xff]
    %v512 = vld [vmem:[#allocation7 + $0x68] sm:$0xff]
    %v513 = vld [vmem:[#allocation7 + $0x70] sm:$0xff]
    %v514 = vld [vmem:[#allocation7 + $0x78] sm:$0xff]
    %v515 = vld [vmem:[#allocation7 + $0x80] sm:$0xff]
    %v516 = vld [vmem:[#allocation7 + $0x88] sm:$0xff]
    %v517 = vld [vmem:[#allocation7 + $0x90] sm:$0xff]
    %v518 = vld [vmem:[#allocation7 + $0x98] sm:$0xff]
    %v519 = vld [vmem:[#allocation7 + $0xa0] sm:$0xff]
    %v520 = vld [vmem:[#allocation7 + $0xa8] sm:$0xff]
    %v521 = vld [vmem:[#allocation7 + $0xb0] sm:$0xff]
    %v522 = vld [vmem:[#allocation7 + $0xb8] sm:$0xff]
    %v523 = vld [vmem:[#allocation7 + $0xc0] sm:$0xff]
    %v524 = vld [vmem:[#allocation7 + $0xc8] sm:$0xff]
    %v525 = vld [vmem:[#allocation7 + $0xd0] sm:$0xff]
    %v526 = vld [vmem:[#allocation7 + $0xd8] sm:$0xff]
    %v527 = vld [vmem:[#allocation7 + $0xe0] sm:$0xff]
    %v528 = vld [vmem:[#allocation7 + $0xe8] sm:$0xff]
    %v529 = vld [vmem:[#allocation7 + $0xf0] sm:$0xff]
    %v530 = vld [vmem:[#allocation7 + $0xf8] sm:$0xff]
    %v531 = vld [vmem:[%s4] sm:$0x3]
    %v533 = vlaneseq
    %v534 = vshrl.u32 %v533, 7
    %v535 = vsub.s32 0, %v534
    %v536 = vrot.slane %v531, %v535
    %v537 = vlaneseq
    %v538 = vshrl.u32 %v537, 7
    %v539 = vsub.s32 1, %v538
    %v540 = vrot.slane %v531, %v539
    %v575 = vunpack.c.l.b16 %v499
    %v576 = vunpack.c.h.b16 %v499
    %v577 = vunpack.c.l.b16 %v500
    %v578 = vunpack.c.h.b16 %v500
    %v579 = vunpack.c.l.b16 %v501
    %v580 = vunpack.c.h.b16 %v501
    %v581 = vunpack.c.l.b16 %v502
    %v582 = vunpack.c.h.b16 %v502
    %v583 = vunpack.c.l.b16 %v503
    %v584 = vunpack.c.h.b16 %v503
    %v585 = vunpack.c.l.b16 %v504
    %v586 = vunpack.c.h.b16 %v504
    %v587 = vunpack.c.l.b16 %v505
    %v588 = vunpack.c.h.b16 %v505
    %v589 = vunpack.c.l.b16 %v506
    %v590 = vunpack.c.h.b16 %v506
    %v591 = vunpack.c.l.b16 %v507
    %v592 = vunpack.c.h.b16 %v507
    %v593 = vunpack.c.l.b16 %v508
    %v594 = vunpack.c.h.b16 %v508
    %v595 = vunpack.c.l.b16 %v509
    %v596 = vunpack.c.h.b16 %v509
    %v597 = vunpack.c.l.b16 %v510
    %v598 = vunpack.c.h.b16 %v510
    %v599 = vunpack.c.l.b16 %v511
    %v600 = vunpack.c.h.b16 %v511
    %v601 = vunpack.c.l.b16 %v512
    %v602 = vunpack.c.h.b16 %v512
    %v603 = vunpack.c.l.b16 %v513
    %v604 = vunpack.c.h.b16 %v513
    %v605 = vunpack.c.l.b16 %v514
    %v606 = vunpack.c.h.b16 %v514
    %v607 = vunpack.c.l.b16 %v515
    %v608 = vunpack.c.h.b16 %v515
    %v609 = vunpack.c.l.b16 %v516
    %v610 = vunpack.c.h.b16 %v516
    %v611 = vunpack.c.l.b16 %v517
    %v612 = vunpack.c.h.b16 %v517
    %v613 = vunpack.c.l.b16 %v518
    %v614 = vunpack.c.h.b16 %v518
    %v615 = vunpack.c.l.b16 %v519
    %v616 = vunpack.c.h.b16 %v519
    %v617 = vunpack.c.l.b16 %v520
    %v618 = vunpack.c.h.b16 %v520
    %v619 = vunpack.c.l.b16 %v521
    %v620 = vunpack.c.h.b16 %v521
    %v621 = vunpack.c.l.b16 %v522
    %v622 = vunpack.c.h.b16 %v522
    %v623 = vunpack.c.l.b16 %v523
    %v624 = vunpack.c.h.b16 %v523
    %v625 = vunpack.c.l.b16 %v524
    %v626 = vunpack.c.h.b16 %v524
    %v627 = vunpack.c.l.b16 %v525
    %v628 = vunpack.c.h.b16 %v525
    %v629 = vunpack.c.l.b16 %v526
    %v630 = vunpack.c.h.b16 %v526
    %v631 = vunpack.c.l.b16 %v527
    %v632 = vunpack.c.h.b16 %v527
    %v633 = vunpack.c.l.b16 %v528
    %v634 = vunpack.c.h.b16 %v528
    %v635 = vunpack.c.l.b16 %v529
    %v636 = vunpack.c.h.b16 %v529
    %v637 = vunpack.c.l.b16 %v530
    %v638 = vunpack.c.h.b16 %v530
    %v639 = vpack.c.b16 %v577, %v575
    %v640 = vpack.c.b16 %v578, %v576
    %v641 = vpack.c.b16 %v581, %v579
    %v642 = vpack.c.b16 %v582, %v580
    %v643 = vpack.c.b16 %v585, %v583
    %v644 = vpack.c.b16 %v586, %v584
    %v645 = vpack.c.b16 %v589, %v587
    %v646 = vpack.c.b16 %v590, %v588
    %v647 = vpack.c.b16 %v593, %v591
    %v648 = vpack.c.b16 %v594, %v592
    %v649 = vpack.c.b16 %v597, %v595
    %v650 = vpack.c.b16 %v598, %v596
    %v651 = vpack.c.b16 %v601, %v599
    %v652 = vpack.c.b16 %v602, %v600
    %v653 = vpack.c.b16 %v605, %v603
    %v654 = vpack.c.b16 %v606, %v604
    %v655 = vpack.c.b16 %v609, %v607
    %v656 = vpack.c.b16 %v610, %v608
    %v657 = vpack.c.b16 %v613, %v611
    %v658 = vpack.c.b16 %v614, %v612
    %v659 = vpack.c.b16 %v617, %v615
    %v660 = vpack.c.b16 %v618, %v616
    %v661 = vpack.c.b16 %v621, %v619
    %v662 = vpack.c.b16 %v622, %v620
    %v663 = vpack.c.b16 %v625, %v623
    %v664 = vpack.c.b16 %v626, %v624
    %v665 = vpack.c.b16 %v629, %v627
    %v666 = vpack.c.b16 %v630, %v628
    %v667 = vpack.c.b16 %v633, %v631
    %v668 = vpack.c.b16 %v634, %v632
    %v669 = vpack.c.b16 %v637, %v635
    %v670 = vpack.c.b16 %v638, %v636
    %703 = vmatprep.subr.bf16.mxu0 %v640
    %704 = vmatpush1.bf16.msra.mxu0 %v639
    %705 = vmatprep.subr.bf16.mxu0 %v642
    %706 = vmatpush1.bf16.msra.mxu0 %v641
    %707 = vmatprep.subr.bf16.mxu0 %v644
    %708 = vmatpush1.bf16.msra.mxu0 %v643
    %709 = vmatprep.subr.bf16.mxu0 %v646
    %710 = vmatpush1.bf16.msra.mxu0 %v645
    %711 = vmatprep.subr.bf16.mxu0 %v648
    %712 = vmatpush1.bf16.msra.mxu0 %v647
    %713 = vmatprep.subr.bf16.mxu0 %v650
    %714 = vmatpush1.bf16.msra.mxu0 %v649
    %715 = vmatprep.subr.bf16.mxu0 %v652
    %716 = vmatpush1.bf16.msra.mxu0 %v651
    %717 = vmatprep.subr.bf16.mxu0 %v654
    %718 = vmatpush1.bf16.msra.mxu0 %v653
    %719 = vmatprep.subr.bf16.mxu0 %v656
    %720 = vmatpush1.bf16.msra.mxu0 %v655
    %721 = vmatprep.subr.bf16.mxu0 %v658
    %722 = vmatpush1.bf16.msra.mxu0 %v657
    %723 = vmatprep.subr.bf16.mxu0 %v660
    %724 = vmatpush1.bf16.msra.mxu0 %v659
    %725 = vmatprep.subr.bf16.mxu0 %v662
    %726 = vmatpush1.bf16.msra.mxu0 %v661
    %727 = vmatprep.subr.bf16.mxu0 %v664
    %728 = vmatpush1.bf16.msra.mxu0 %v663
    %729 = vmatprep.subr.bf16.mxu0 %v666
    %730 = vmatpush1.bf16.msra.mxu0 %v665
    %731 = vmatprep.subr.bf16.mxu0 %v668
    %732 = vmatpush1.bf16.msra.mxu0 %v667
    %733 = vmatprep.subr.bf16.mxu0 %v670
    %734 = vmatpush1.bf16.msra.mxu0 %v669
    %735 = vmatprep.mubr.bf16.mxu0 %v498
    %736 = vmatmul.mubr.bf16.gmra.mrb[0].mxu0 %v497
    %v737 = vpop.f32.mrb[0].mxu0
    %v738 = vadd.f32 %v536, %v737
    %v739 = vpop.f32.mrb[0].mxu0
    %v740 = vadd.f32 %v540, %v739
    %v741 = vpop.f32.mrb[0].mxu0
    %v742 = vpop.f32.mrb[0].mxu0
    %743 = vdwg.mxu0
    %v744 = vmax.f32 %v738, 0.0
    %v745 = vmax.f32 %v740, 0.0
    %v746 = vpack.c.bf16 %v744, %v744
    %v747 = vpack.c.bf16 %v745, %v745
    %v748 = vld [vmem:[#allocation8] sm:$0xf]
    %v749 = vld [vmem:[#allocation8 + $0x4] sm:$0xf]
    %v750 = vld [vmem:[#allocation8 + $0x8] sm:$0xf]
    %v751 = vld [vmem:[#allocation8 + $0xc] sm:$0xf]
    %v752 = vld [vmem:[#allocation8 + $0x10] sm:$0xf]
    %v753 = vld [vmem:[#allocation8 + $0x14] sm:$0xf]
    %v754 = vld [vmem:[#allocation8 + $0x18] sm:$0xf]
    %v755 = vld [vmem:[#allocation8 + $0x1c] sm:$0xf]
    %v756 = vld [vmem:[#allocation8 + $0x20] sm:$0xf]
    %v757 = vld [vmem:[#allocation8 + $0x24] sm:$0xf]
    %v758 = vld [vmem:[#allocation8 + $0x28] sm:$0xf]
    %v759 = vld [vmem:[#allocation8 + $0x2c] sm:$0xf]
    %v760 = vld [vmem:[#allocation8 + $0x30] sm:$0xf]
    %v761 = vld [vmem:[#allocation8 + $0x34] sm:$0xf]
    %v762 = vld [vmem:[#allocation8 + $0x38] sm:$0xf]
    %v763 = vld [vmem:[#allocation8 + $0x3c] sm:$0xf]
    %v764 = vld [vmem:[#allocation8 + $0x40] sm:$0xf]
    %v765 = vld [vmem:[#allocation8 + $0x44] sm:$0xf]
    %v766 = vld [vmem:[#allocation8 + $0x48] sm:$0xf]
    %v767 = vld [vmem:[#allocation8 + $0x4c] sm:$0xf]
    %v768 = vld [vmem:[#allocation8 + $0x50] sm:$0xf]
    %v769 = vld [vmem:[#allocation8 + $0x54] sm:$0xf]
    %v770 = vld [vmem:[#allocation8 + $0x58] sm:$0xf]
    %v771 = vld [vmem:[#allocation8 + $0x5c] sm:$0xf]
    %v772 = vld [vmem:[#allocation8 + $0x60] sm:$0xf]
    %v773 = vld [vmem:[#allocation8 + $0x64] sm:$0xf]
    %v774 = vld [vmem:[#allocation8 + $0x68] sm:$0xf]
    %v775 = vld [vmem:[#allocation8 + $0x6c] sm:$0xf]
    %v776 = vld [vmem:[#allocation8 + $0x70] sm:$0xf]
    %v777 = vld [vmem:[#allocation8 + $0x74] sm:$0xf]
    %v778 = vld [vmem:[#allocation8 + $0x78] sm:$0xf]
    %v779 = vld [vmem:[#allocation8 + $0x7c] sm:$0xf]
    %v780 = vld [vmem:[%s6] sm:$0x1]
    %v782 = vlaneseq
    %v783 = vshrl.u32 %v782, 7
    %v784 = vsub.s32 0, %v783
    %v785 = vrot.slane %v780, %v784
    %v819 = vunpack.c.l.b16 %v748
    %v820 = vunpack.c.l.b16 %v749
    %v821 = vunpack.c.l.b16 %v750
    %v822 = vunpack.c.l.b16 %v751
    %v823 = vunpack.c.l.b16 %v752
    %v824 = vunpack.c.l.b16 %v753
    %v825 = vunpack.c.l.b16 %v754
    %v826 = vunpack.c.l.b16 %v755
    %v827 = vunpack.c.l.b16 %v756
    %v828 = vunpack.c.l.b16 %v757
    %v829 = vunpack.c.l.b16 %v758
    %v830 = vunpack.c.l.b16 %v759
    %v831 = vunpack.c.l.b16 %v760
    %v832 = vunpack.c.l.b16 %v761
    %v833 = vunpack.c.l.b16 %v762
    %v834 = vunpack.c.l.b16 %v763
    %v835 = vunpack.c.l.b16 %v764
    %v836 = vunpack.c.l.b16 %v765
    %v837 = vunpack.c.l.b16 %v766
    %v838 = vunpack.c.l.b16 %v767
    %v839 = vunpack.c.l.b16 %v768
    %v840 = vunpack.c.l.b16 %v769
    %v841 = vunpack.c.l.b16 %v770
    %v842 = vunpack.c.l.b16 %v771
    %v843 = vunpack.c.l.b16 %v772
    %v844 = vunpack.c.l.b16 %v773
    %v845 = vunpack.c.l.b16 %v774
    %v846 = vunpack.c.l.b16 %v775
    %v847 = vunpack.c.l.b16 %v776
    %v848 = vunpack.c.l.b16 %v777
    %v849 = vunpack.c.l.b16 %v778
    %v850 = vunpack.c.l.b16 %v779
    %v851 = vpack.c.b16 %v820, %v819
    %v852 = vpack.c.b16 %v822, %v821
    %v853 = vpack.c.b16 %v824, %v823
    %v854 = vpack.c.b16 %v826, %v825
    %v855 = vpack.c.b16 %v828, %v827
    %v856 = vpack.c.b16 %v830, %v829
    %v857 = vpack.c.b16 %v832, %v831
    %v858 = vpack.c.b16 %v834, %v833
    %v859 = vpack.c.b16 %v836, %v835
    %v860 = vpack.c.b16 %v838, %v837
    %v861 = vpack.c.b16 %v840, %v839
    %v862 = vpack.c.b16 %v842, %v841
    %v863 = vpack.c.b16 %v844, %v843
    %v864 = vpack.c.b16 %v846, %v845
    %v865 = vpack.c.b16 %v848, %v847
    %v866 = vpack.c.b16 %v850, %v849
    %883 = vmatprep.subr.bf16.mxu0 0
    %884 = vmatpush1.bf16.msra.mxu0 %v851
    %885 = vmatprep.subr.bf16.mxu0 0
    %886 = vmatpush1.bf16.msra.mxu0 %v852
    %887 = vmatprep.subr.bf16.mxu0 0
    %888 = vmatpush1.bf16.msra.mxu0 %v853
    %889 = vmatprep.subr.bf16.mxu0 0
    %890 = vmatpush1.bf16.msra.mxu0 %v854
    %891 = vmatprep.subr.bf16.mxu0 0
    %892 = vmatpush1.bf16.msra.mxu0 %v855
    %893 = vmatprep.subr.bf16.mxu0 0
    %894 = vmatpush1.bf16.msra.mxu0 %v856
    %895 = vmatprep.subr.bf16.mxu0 0
    %896 = vmatpush1.bf16.msra.mxu0 %v857
    %897 = vmatprep.subr.bf16.mxu0 0
    %898 = vmatpush1.bf16.msra.mxu0 %v858
    %899 = vmatprep.subr.bf16.mxu0 0
    %900 = vmatpush1.bf16.msra.mxu0 %v859
    %901 = vmatprep.subr.bf16.mxu0 0
    %902 = vmatpush1.bf16.msra.mxu0 %v860
    %903 = vmatprep.subr.bf16.mxu0 0
    %904 = vmatpush1.bf16.msra.mxu0 %v861
    %905 = vmatprep.subr.bf16.mxu0 0
    %906 = vmatpush1.bf16.msra.mxu0 %v862
    %907 = vmatprep.subr.bf16.mxu0 0
    %908 = vmatpush1.bf16.msra.mxu0 %v863
    %909 = vmatprep.subr.bf16.mxu0 0
    %910 = vmatpush1.bf16.msra.mxu0 %v864
    %911 = vmatprep.subr.bf16.mxu0 0
    %912 = vmatpush1.bf16.msra.mxu0 %v865
    %913 = vmatprep.subr.bf16.mxu0 0
    %914 = vmatpush1.bf16.msra.mxu0 %v866
    %915 = vmatprep.mubr.bf16.mxu0 %v747
    %916 = vmatmul.mubr.bf16.gmra.mrb[0].mxu0 %v746
    %v917 = vpop.f32.mrb[0].mxu0
    %v918 = vadd.f32 %v785, %v917
    %v919 = vpop.f32.mrb[0].mxu0
    %v920 = vpop.f32.mrb[0].mxu0
    %v921 = vpop.f32.mrb[0].mxu0
    %922 = vdwg.mxu0
    %v923 = vmax.f32 %v918, 0.0
    %v924 = vpack.c.bf16 %v923, %v923
    %v925 = vld [vmem:[#allocation10] sm:$0xf]
    %v926 = vld [vmem:[#allocation10 + $0x4] sm:$0xf]
    %v927 = vld [vmem:[#allocation10 + $0x8] sm:$0xf]
    %v928 = vld [vmem:[#allocation10 + $0xc] sm:$0xf]
    %v929 = vld [vmem:[#allocation10 + $0x10] sm:$0xf]
    %v930 = vld [vmem:[#allocation10 + $0x14] sm:$0xf]
    %v931 = vld [vmem:[#allocation10 + $0x18] sm:$0xf]
    %v932 = vld [vmem:[#allocation10 + $0x1c] sm:$0xf]
    %v933 = vld [vmem:[#allocation10 + $0x20] sm:$0xf]
    %v934 = vld [vmem:[#allocation10 + $0x24] sm:$0xf]
    %v935 = vld [vmem:[#allocation10 + $0x28] sm:$0xf]
    %v936 = vld [vmem:[#allocation10 + $0x2c] sm:$0xf]
    %v937 = vld [vmem:[#allocation10 + $0x30] sm:$0xf]
    %v938 = vld [vmem:[#allocation10 + $0x34] sm:$0xf]
    %v939 = vld [vmem:[#allocation10 + $0x38] sm:$0xf]
    %v940 = vld [vmem:[#allocation10 + $0x3c] sm:$0xf]
    %v941 = vld [vmem:[%s8] sm:$0x1]
    %v943 = vlaneseq
    %v944 = vshrl.u32 %v943, 7
    %v945 = vsub.s32 0, %v944
    %v946 = vrot.slane %v941, %v945
    %v964 = vunpack.c.l.b16 %v925
    %v965 = vunpack.c.l.b16 %v926
    %v966 = vunpack.c.l.b16 %v927
    %v967 = vunpack.c.l.b16 %v928
    %v968 = vunpack.c.l.b16 %v929
    %v969 = vunpack.c.l.b16 %v930
    %v970 = vunpack.c.l.b16 %v931
    %v971 = vunpack.c.l.b16 %v932
    %v972 = vunpack.c.l.b16 %v933
    %v973 = vunpack.c.l.b16 %v934
    %v974 = vunpack.c.l.b16 %v935
    %v975 = vunpack.c.l.b16 %v936
    %v976 = vunpack.c.l.b16 %v937
    %v977 = vunpack.c.l.b16 %v938
    %v978 = vunpack.c.l.b16 %v939
    %v979 = vunpack.c.l.b16 %v940
    %v980 = vpack.c.b16 %v965, %v964
    %v981 = vpack.c.b16 %v967, %v966
    %v982 = vpack.c.b16 %v969, %v968
    %v983 = vpack.c.b16 %v971, %v970
    %v984 = vpack.c.b16 %v973, %v972
    %v985 = vpack.c.b16 %v975, %v974
    %v986 = vpack.c.b16 %v977, %v976
    %v987 = vpack.c.b16 %v979, %v978
    %996 = vmatprep.subr.bf16.mxu0 0
    %997 = vmatpush1.bf16.msra.mxu0 %v980
    %998 = vmatprep.subr.bf16.mxu0 0
    %999 = vmatpush1.bf16.msra.mxu0 %v981
    %1000 = vmatprep.subr.bf16.mxu0 0
    %1001 = vmatpush1.bf16.msra.mxu0 %v982
    %1002 = vmatprep.subr.bf16.mxu0 0
    %1003 = vmatpush1.bf16.msra.mxu0 %v983
    %1004 = vmatprep.subr.bf16.mxu0 0
    %1005 = vmatpush1.bf16.msra.mxu0 %v984
    %1006 = vmatprep.subr.bf16.mxu0 0
    %1007 = vmatpush1.bf16.msra.mxu0 %v985
    %1008 = vmatprep.subr.bf16.mxu0 0
    %1009 = vmatpush1.bf16.msra.mxu0 %v986
    %1010 = vmatprep.subr.bf16.mxu0 0
    %1011 = vmatpush1.bf16.msra.mxu0 %v987
    %1012 = vmatprep.subr.bf16.mxu0 0
    %1013 = vmatpush1.bf16.msra.mxu0 0
    %1014 = vmatprep.subr.bf16.mxu0 0
    %1015 = vmatpush1.bf16.msra.mxu0 0
    %1016 = vmatprep.subr.bf16.mxu0 0
    %1017 = vmatpush1.bf16.msra.mxu0 0
    %1018 = vmatprep.subr.bf16.mxu0 0
    %1019 = vmatpush1.bf16.msra.mxu0 0
    %1020 = vmatprep.subr.bf16.mxu0 0
    %1021 = vmatpush1.bf16.msra.mxu0 0
    %1022 = vmatprep.subr.bf16.mxu0 0
    %1023 = vmatpush1.bf16.msra.mxu0 0
    %1024 = vmatprep.subr.bf16.mxu0 0
    %1025 = vmatpush1.bf16.msra.mxu0 0
    %1026 = vmatprep.subr.bf16.mxu0 0
    %1027 = vmatpush1.bf16.msra.mxu0 0
    %1028 = vmatprep.mubr.bf16.mxu0 0
    %1029 = vmatmul.mubr.bf16.gmra.mrb[0].mxu0 %v924
    %v1030 = vpop.f32.mrb[0].mxu0
    %v1031 = vadd.f32 %v946, %v1030
    %v1032 = vpop.f32.mrb[0].mxu0
    %v1033 = vpop.f32.mrb[0].mxu0
    %v1034 = vpop.f32.mrb[0].mxu0
    %1035 = vdwg.mxu0
    %v1036 = vxor.u32 %v1031, 2147483648
    %v1037 = vmul.f32 %v1036, 1.442695
    %v1038 = vpow.pop %v1037
    %v1039 = vadd.f32 %v1038, 1.0
    %v1040 = vrcp.pop %v1039
    %v1041 = vmul.f32 1.0, %v1040
    %1042 = vst [vmem:[#allocation11] sm:$0xff] %v1041
    // Predicated region
    $region58: #{tpu_custom_call.1} parent=1 // pred_check
      _
    $region59: #{tpu_custom_call.1} parent=1 // pred_check_branch
      %1044 = sbr.rel (0) target = $region61
    $region60: #{tpu_custom_call.1} parent=1 // pred_region
      %s1046 = ssub.s32 128, 128
      %1047 = vsyncadd [#allocation4], %s1046
      %s1049 = sshll.u32 [#allocation11], 4
      %s1050 = int_to_ptr.vmem [resolvable:$true] %s1049
      %1052 = dma.vmem_to_hbm [thread:$0]  %s1050, 128, %s9, [#allocation4]
    $region61: #{tpu_custom_call.1} parent=1 // pred_fallthru
      _
    // Predicated region
    $region62: #{tpu_custom_call.1} parent=1 // pred_check
      _
    $region63: #{tpu_custom_call.1} parent=1 // pred_check_branch
      %1054 = sbr.rel (0) target = $region65
    $region64: #{tpu_custom_call.1} parent=1 // pred_region
      %1055 = dma.done [#allocation4], 128
    $region65: #{tpu_custom_call.1} parent=1 // pred_fallthru
      _
    %1056 = vsyncpa [#allocation3], 1
    %1057 = vsyncpa [#allocation6], 1
    %1058 = vsyncpa [#allocation9], 1
    %1059 = vsyncpa [#allocation4], 1

</llo_original>
